<compile_context>
chip_gen: v6e
topology: v6e:2x2x1
jax: 0.10.0
libtpu: 0.0.40
codegen_flags: <defaults>
</compile_context>

<pallas_src>
import jax
import jax.numpy as jnp
from jax.experimental import pallas as pl
from jax.experimental.pallas import tpu as pltpu


def _fused_conv_kernel(p_ref, w_ref, o_ref):
    """One batch element per grid step.

    p_ref : (1, Ho*Wo, 9*Cin)   VMEM  im2col patches for this batch element
    w_ref : (9*Cin, Cout)       VMEM  folded (3x3 then 1x1) conv weights
    o_ref : (1, Ho*Wo, Cout)    VMEM
    """
    o_ref[0] = jnp.dot(
        p_ref[0], w_ref[...], preferred_element_type=jnp.float32
    ).astype(o_ref.dtype)


def main_block_forward(x_nchw, w1_oihw, w2_oihw):
    """x_nchw: (N, Cin, H, W); w1_oihw: (Cmid, Cin, 3, 3); w2_oihw: (Cout, Cmid, 1, 1)."""
    N, Cin, H, W = x_nchw.shape
    Cout = w2_oihw.shape[0]
    Ho, Wo = H - 2, W - 2
    K = 9 * Cin

    # ---- plain-JAX glue (layout + algebraic prep) ----
    x_nhwc = jnp.transpose(x_nchw, (0, 2, 3, 1))            # (N, H, W, Cin)

    # Fold the 1x1 conv into the 3x3 weights:
    #   Wf[ki,kj,ci,co] = sum_m W1_hwio[ki,kj,ci,m] * W2[m,co]
    w1_hwio = jnp.transpose(w1_oihw, (2, 3, 1, 0))          # (3, 3, Cin, Cmid)
    w2_mo = jnp.transpose(w2_oihw[:, :, 0, 0], (1, 0))      # (Cmid, Cout)
    wf = jnp.einsum('hwim,mo->hwio', w1_hwio, w2_mo)        # (3, 3, Cin, Cout)
    wf2d = wf.reshape(K, Cout)                              # tap-major, chan-minor

    # im2col: ordering (ki, kj, ci) matches wf2d's row ordering.
    cols = []
    for ki in range(3):
        for kj in range(3):
            cols.append(x_nhwc[:, ki:ki + Ho, kj:kj + Wo, :])   # (N, Ho, Wo, Cin)
    patches = jnp.concatenate(cols, axis=-1)                # (N, Ho, Wo, 9*Cin)
    patches = patches.reshape(N, Ho * Wo, K)                # (N, Ho*Wo, 9*Cin)

    # ---- Pallas kernel: one matmul per batch element ----
    out = pl.pallas_call(
        _fused_conv_kernel,
        out_shape=jax.ShapeDtypeStruct((N, Ho * Wo, Cout), x_nchw.dtype),
        grid_spec=pltpu.PrefetchScalarGridSpec(
            num_scalar_prefetch=0,
            grid=(N,),
            in_specs=[
                pl.BlockSpec((1, Ho * Wo, K), lambda n: (n, 0, 0)),
                pl.BlockSpec((K, Cout), lambda n: (0, 0)),   # grid-invariant weights
            ],
            out_specs=pl.BlockSpec((1, Ho * Wo, Cout), lambda n: (n, 0, 0)),
        ),
        compiler_params=pltpu.CompilerParams(
            dimension_semantics=("parallel",)),              # v7x: 2 TCs, one per batch elem
    )(patches, wf2d)

    # (N, Ho*Wo, Cout) -> (N, Cout, Ho, Wo)
    out = out.reshape(N, Ho, Wo, Cout)
    return jnp.transpose(out, (0, 3, 1, 2))


def _reference(x_nchw, w1_oihw, w2_oihw):
    """Plain-JAX reference (matches torch.nn.functional.conv2d, NCHW/OIHW)."""
    y = jax.lax.conv_general_dilated(
        x_nchw, w1_oihw, window_strides=(1, 1), padding="VALID",
        dimension_numbers=("NCHW", "OIHW", "NCHW"))
    y = jax.lax.conv_general_dilated(
        y, w2_oihw, window_strides=(1, 1), padding="VALID",
        dimension_numbers=("NCHW", "OIHW", "NCHW"))
    return y


if __name__ == "__main__":
    # Module config: main_block(inp=4, out=8, filters=16)
    inp, out_ch, filters = 4, 8, 16
    N, H, W = 2, 16, 16

    key = jax.random.PRNGKey(0)
    kx, k1, k2 = jax.random.split(key, 3)
    x = jax.random.normal(kx, (N, inp, H, W), dtype=jnp.float32)
    # Deterministic synthetic weights (PyTorch OIHW layout).
    w1 = jax.random.normal(k1, (out_ch, inp, 3, 3), dtype=jnp.float32) * 0.1
    w2 = jax.random.normal(k2, (filters, out_ch, 1, 1), dtype=jnp.float32) * 0.1

    y = main_block_forward(x, w1, w2)
    y = jax.block_until_ready(y)

    y_ref = jax.block_until_ready(_reference(x, w1, w2))
    assert y.shape == (N, filters, H - 2, W - 2), y.shape
    assert jnp.allclose(y, y_ref, atol=1e-4, rtol=1e-4), "mismatch vs reference"

    print("KERNEL_OK")
</pallas_src>

<mosaic_0001>
module attributes {stable_mosaic.version = 11 : i64} {
  func.func @_fused_conv_kernel(%arg0: i32, %arg1: memref<1x196x36xf32, #tpu.memory_space<vmem>>, %arg2: memref<36x16xf32, #tpu.memory_space<vmem>>, %arg3: memref<1x196x16xf32, #tpu.memory_space<vmem>>) attributes {dimension_semantics = [#tpu.dimension_semantics<parallel>], iteration_bounds = array<i64: 2>, scalar_prefetch = 0 : i64, scratch_operands = 0 : i64, tpu.core_type = #tpu.core_type<tc>, window_params = [{transform_indices = @transform_0, window_bounds = array<i64: 1, 196, 36>}, {pipeline_mode = #tpu.pipeline_mode<synchronous>, transform_indices = @transform_1, window_bounds = array<i64: 36, 16>}, {transform_indices = @transform_2, window_bounds = array<i64: 1, 196, 16>}]} {
    %c0 = arith.constant 0 : index
    %c0_0 = arith.constant 0 : index
    %c0_1 = arith.constant 0 : index
    %0 = vector.load %arg1[%c0, %c0_0, %c0_1] : memref<1x196x36xf32, #tpu.memory_space<vmem>>, vector<1x196x36xf32>
    %1 = vector.shape_cast %0 : vector<1x196x36xf32> to vector<196x36xf32>
    %c0_2 = arith.constant 0 : index
    %c0_3 = arith.constant 0 : index
    %2 = vector.load %arg2[%c0_2, %c0_3] : memref<36x16xf32, #tpu.memory_space<vmem>>, vector<36x16xf32>
    %cst = arith.constant dense<0.000000e+00> : vector<196x16xf32>
    %3 = tpu.matmul %1, %2, %cst {dimension_numbers = #tpu.dot_dimension_numbers<[1], [0], [0], [1], [0, 0, 1, 1], [], []>} : vector<196x36xf32>, vector<36x16xf32>, vector<196x16xf32> -> vector<196x16xf32>
    %c0_4 = arith.constant 0 : index
    %c0_5 = arith.constant 0 : index
    %c0_6 = arith.constant 0 : index
    %4 = vector.load %arg3[%c0_4, %c0_5, %c0_6] : memref<1x196x16xf32, #tpu.memory_space<vmem>>, vector<1x196x16xf32>
    %5 = vector.shape_cast %4 : vector<1x196x16xf32> to vector<196x16xf32>
    %6 = vector.shape_cast %3 : vector<196x16xf32> to vector<1x196x16xf32>
    tpu.vector_store %arg3[%c0_4, %c0_5, %c0_6], %6 {strides = array<i32>} : memref<1x196x16xf32, #tpu.memory_space<vmem>>, vector<1x196x16xf32>,
    return
  }
  func.func @transform_0(%arg0: i32) -> (i32, i32, i32) {
    %c0_i32 = arith.constant 0 : i32
    %c0_i32_0 = arith.constant 0 : i32
    %c0_i32_1 = arith.constant 0 : i32
    return %arg0, %c0_i32, %c0_i32_0 : i32, i32, i32
  }
  func.func @transform_1(%arg0: i32) -> (i32, i32) {
    %c0_i32 = arith.constant 0 : i32
    %c0_i32_0 = arith.constant 0 : i32
    %c0_i32_1 = arith.constant 0 : i32
    return %c0_i32, %c0_i32_0 : i32, i32
  }
  func.func @transform_2(%arg0: i32) -> (i32, i32, i32) {
    %c0_i32 = arith.constant 0 : i32
    %c0_i32_0 = arith.constant 0 : i32
    %c0_i32_1 = arith.constant 0 : i32
    return %arg0, %c0_i32, %c0_i32_0 : i32, i32, i32
  }
}

</mosaic_0001>

<llo_original>
// kernel: tpu_custom_call.1
$region0: #{tpu_custom_call.1}
  #allocation0 [shape = 'u32[]', space=smem, size = 0x4, offset = 0x4, fixed_abs, tag = 'smem constant byte address 0x4 - core index']
  #allocation1 [shape = 'u32[144,128]{1,0:T(1,128)}', space=vmem, size = 0x12000, scoped, tag = 'internal scratch']
  %s0 = inlined_call_operand.vmem [shape: f32[2,196,36], index: 0, kind: input, shape index: {}]
  %s1 = inlined_call_operand.vmem [shape: f32[36,16], index: 1, kind: input, shape index: {}]
  %s2 = inlined_call_operand.vmem [shape: f32[2,196,16], index: 2, kind: output, shape index: {}]
  %s3 = sld [smem:[#allocation0]]
  $region41: #{tpu_custom_call.1} parent=0
    _
  %s5 = ssub.s32 1, %s3
  %s6 = scalar_select 0, %s5, %s3
  loop: start=0, step=1, limit=4
  $region2: #{tpu_custom_call.1} parent=0 // loop_pre_header
    _
  $region3: #{tpu_custom_call.1} parent=0 // loop_header
    %s8 = sphi 0, %s12
    %p9 = scmp.ge.s32.totalorder %s8, 4
    %s18 = sphi 0, %s20
    %s21 = sphi 0, %s18
    %s22 = sphi 0, %s21
    %s38 = sphi 0, %s22
    %s42 = sphi 0, %s42
    %s44 = sphi 0, %s42
    %s45 = sphi 0, %s44
    %s59 = sphi 0, %s45
    %s65 = sphi 0, %s67
    %s68 = sphi 0, %s65
    %s69 = sphi 0, %s68
    %s85 = sphi 0, %s69
  $region4: #{tpu_custom_call.1} parent=0 // loop_header_branch
    %11 = sbr.rel (%p9) target = $region8
  $region5: #{tpu_custom_call.1} parent=0 // loop_body
    %s13 = ssub.s32 %s8, 1
    %s14 = ssub.s32 %s8, 2
    %s15 = sadd.s32 %s8, 1
    %s16 = ssub.s32 %s8, %s15
    %p17 = scmp.eq.s32.totalorder %s16, 0
    %s19 = sadd.s32 %s18, 1
    %s20 = scalar_select %p17, %s18, %s19
    %p23 = pneg %p17
    %p24 = scmp.eq.s32.totalorder %s8, 1
    %p25 = por %p23, %p24
    %p26 = scmp.ne.s32.totalorder %s18, %s21
    %p27 = scmp.eq.s32.totalorder %s8, 0
    %p28 = por %p26, %p27
    %p29 = scmp.ne.s32.totalorder %s18, %s21
    %p30 = scmp.eq.s32.totalorder %s13, 1
    %p31 = por %p29, %p30
    %p32 = scmp.ne.s32.totalorder %s21, %s22
    %p33 = scmp.eq.s32.totalorder %s13, 0
    %p34 = por %p32, %p33
    %p35 = scmp.ne.s32.totalorder %s21, %s22
    %p36 = scmp.eq.s32.totalorder %s14, 1
    %p37 = por %p35, %p36
    %p39 = scmp.ne.s32.totalorder %s22, %s38
    %p40 = scmp.eq.s32.totalorder %s14, 0
    %p41 = por %p39, %p40
    %s43 = sadd.s32 %s42, 1
    %p46 = scmp.eq.s32.totalorder %s8, 1
    %p47 = scmp.ne.s32.totalorder %s42, %s44
    %p48 = scmp.eq.s32.totalorder %s8, 0
    %p49 = por %p47, %p48
    %p50 = scmp.ne.s32.totalorder %s42, %s44
    %p51 = scmp.eq.s32.totalorder %s13, 1
    %p52 = por %p50, %p51
    %p53 = scmp.ne.s32.totalorder %s44, %s45
    %p54 = scmp.eq.s32.totalorder %s13, 0
    %p55 = por %p53, %p54
    %p56 = scmp.ne.s32.totalorder %s44, %s45
    %p57 = scmp.eq.s32.totalorder %s14, 1
    %p58 = por %p56, %p57
    %p60 = scmp.ne.s32.totalorder %s45, %s59
    %p61 = scmp.eq.s32.totalorder %s14, 0
    %p62 = por %p60, %p61
    %s63 = ssub.s32 %s8, %s15
    %p64 = scmp.eq.s32.totalorder %s63, 0
    %s66 = sadd.s32 %s65, 1
    %s67 = scalar_select %p64, %s65, %s66
    %p70 = pneg %p64
    %p71 = scmp.eq.s32.totalorder %s8, 1
    %p72 = por %p70, %p71
    %p73 = scmp.ne.s32.totalorder %s65, %s68
    %p74 = scmp.eq.s32.totalorder %s8, 0
    %p75 = por %p73, %p74
    %p76 = scmp.ne.s32.totalorder %s65, %s68
    %p77 = scmp.eq.s32.totalorder %s13, 1
    %p78 = por %p76, %p77
    %p79 = scmp.ne.s32.totalorder %s68, %s69
    %p80 = scmp.eq.s32.totalorder %s13, 0
    %p81 = por %p79, %p80
    %p82 = scmp.ne.s32.totalorder %s68, %s69
    %p83 = scmp.eq.s32.totalorder %s14, 1
    %p84 = por %p82, %p83
    %p86 = scmp.ne.s32.totalorder %s69, %s85
    %p87 = scmp.eq.s32.totalorder %s14, 0
    %p88 = por %p86, %p87
    %p89 = scmp.le.s32.totalorder 1, %s8
    %p90 = scmp.lt.s32.totalorder %s8, 3
    %p91 = pnand %p89, %p90
    %p92 = pneg %p91
    // Predicated region
    $region9: #{tpu_custom_call.1} parent=5 // pred_check
      _
    $region10: #{tpu_custom_call.1} parent=5 // pred_check_branch
      %94 = sbr.rel (%p91) target = $region12
    $region11: #{tpu_custom_call.1} parent=5 // pred_region
      %s95 = ssub.s32 %s8, 1
      // Predicated region
      $region13: #{tpu_custom_call.1} parent=11 // pred_check
        %p96 = pneg %p55
      $region14: #{tpu_custom_call.1} parent=11 // pred_check_branch
        %98 = sbr.rel (%p96) target = $region16
      $region15: #{tpu_custom_call.1} parent=11 // pred_region
        _
      $region16: #{tpu_custom_call.1} parent=11 // pred_fallthru
        _
    $region12: #{tpu_custom_call.1} parent=5 // pred_fallthru
      _
    %p99 = scmp.lt.s32.totalorder %s8, 2
    // Predicated region
    $region17: #{tpu_custom_call.1} parent=5 // pred_check
      %p100 = pneg %p99
    $region18: #{tpu_custom_call.1} parent=5 // pred_check_branch
      %102 = sbr.rel (%p100) target = $region20
    $region19: #{tpu_custom_call.1} parent=5 // pred_region
      // Predicated region
      $region21: #{tpu_custom_call.1} parent=19 // pred_check
        %p103 = pneg %p28
      $region22: #{tpu_custom_call.1} parent=19 // pred_check_branch
        %105 = sbr.rel (%p103) target = $region24
      $region23: #{tpu_custom_call.1} parent=19 // pred_region
        %p106 = scmp.lt.s32.totalorder %s8, 1
        %s107 = scalar_select %p106, %s8, 1
        %s108 = smul.addr %s107, 25
        %s109 = smul.addr %s108, 8
        %s110 = scalar_lea.vmem %s0, %s109
      $region24: #{tpu_custom_call.1} parent=19 // pred_fallthru
        _
    $region20: #{tpu_custom_call.1} parent=5 // pred_fallthru
      _
    %p111 = scmp.le.s32.totalorder 1, %s8
    %p112 = scmp.lt.s32.totalorder %s8, 3
    %p113 = pnand %p111, %p112
    %p114 = pneg %p113
    // Predicated region
    $region25: #{tpu_custom_call.1} parent=5 // pred_check
      _
    $region26: #{tpu_custom_call.1} parent=5 // pred_check_branch
      %116 = sbr.rel (%p113) target = $region28
    $region27: #{tpu_custom_call.1} parent=5 // pred_region
      %s117 = ssub.s32 %s8, 1
      %p118 = scmp.lt.s32.totalorder %s13, 1
      %s119 = scalar_select %p118, %s13, 1
      %s120 = smul.addr %s119, 25
      %s121 = smul.addr %s120, 8
      %s122 = scalar_lea.vmem %s0, %s121
      %p123 = pneg %p34
      %p124 = pneg %p31
      %p125 = pneg %p55
      %p126 = pneg %p52
      %p127 = pneg %p81
      %p128 = pneg %p78
      %p129 = scmp.lt.s32.totalorder %s13, 1
      %s130 = scalar_select %p129, %s13, 1
      %s131 = smul.addr %s130, 25
      %s132 = smul.addr %s131, 8
      %s133 = scalar_lea.vmem %s2, %s132
      %p134 = scmp.lt.s32.totalorder %s13, 1
      %s135 = scalar_select %p134, %s13, 1
      %s136 = smul.addr %s135, 25
      %s137 = smul.addr %s136, 8
      %s138 = scalar_lea.vmem %s0, %s137
      %p139 = scmp.lt.s32.totalorder %s13, 1
      %s140 = scalar_select %p139, %s13, 1
      %s141 = smul.addr %s140, 25
      %s142 = smul.addr %s141, 8
      %s143 = scalar_lea.vmem %s2, %s142
      %v144 = vld [vmem:[%s138] sm:$0xff]
      %v145 = vld [vmem:[%s138 + $0x8] sm:$0xff]
      %v146 = vld [vmem:[%s138 + $0x10] sm:$0xff]
      %v147 = vld [vmem:[%s138 + $0x18] sm:$0xff]
      %v148 = vld [vmem:[%s138 + $0x20] sm:$0xff]
      %v149 = vld [vmem:[%s138 + $0x28] sm:$0xff]
      %v150 = vld [vmem:[%s138 + $0x30] sm:$0xff]
      %v151 = vld [vmem:[%s138 + $0x38] sm:$0xff]
      %v152 = vld [vmem:[%s138 + $0x40] sm:$0xff]
      %v153 = vld [vmem:[%s138 + $0x48] sm:$0xff]
      %v154 = vld [vmem:[%s138 + $0x50] sm:$0xff]
      %v155 = vld [vmem:[%s138 + $0x58] sm:$0xff]
      %v156 = vld [vmem:[%s138 + $0x60] sm:$0xff]
      %v157 = vld [vmem:[%s138 + $0x68] sm:$0xff]
      %v158 = vld [vmem:[%s138 + $0x70] sm:$0xff]
      %v159 = vld [vmem:[%s138 + $0x78] sm:$0xff]
      %v160 = vld [vmem:[%s138 + $0x80] sm:$0xff]
      %v161 = vld [vmem:[%s138 + $0x88] sm:$0xff]
      %v162 = vld [vmem:[%s138 + $0x90] sm:$0xff]
      %v163 = vld [vmem:[%s138 + $0x98] sm:$0xff]
      %v164 = vld [vmem:[%s138 + $0xa0] sm:$0xff]
      %v165 = vld [vmem:[%s138 + $0xa8] sm:$0xff]
      %v166 = vld [vmem:[%s138 + $0xb0] sm:$0xff]
      %v167 = vld [vmem:[%s138 + $0xb8] sm:$0xff]
      %v168 = vld [vmem:[%s138 + $0xc0] sm:$0xf]
      %v169 = vld [vmem:[%s1] sm:$0xff]
      %v170 = vld [vmem:[%s1 + $0x8] sm:$0xff]
      %v171 = vld [vmem:[%s1 + $0x10] sm:$0xff]
      %v172 = vld [vmem:[%s1 + $0x18] sm:$0xff]
      %v173 = vld [vmem:[%s1 + $0x20] sm:$0xf]
      %vm174 = vcmask 293888
      %v176 = vsel %vm174, %v144, 0
      %v179 = vsel %vm174, %v145, 0
      %v182 = vsel %vm174, %v146, 0
      %v185 = vsel %vm174, %v147, 0
      %v188 = vsel %vm174, %v148, 0
      %v191 = vsel %vm174, %v149, 0
      %v194 = vsel %vm174, %v150, 0
      %v197 = vsel %vm174, %v151, 0
      %v200 = vsel %vm174, %v152, 0
      %v203 = vsel %vm174, %v153, 0
      %v206 = vsel %vm174, %v154, 0
      %v209 = vsel %vm174, %v155, 0
      %v212 = vsel %vm174, %v156, 0
      %v215 = vsel %vm174, %v157, 0
      %v218 = vsel %vm174, %v158, 0
      %v221 = vsel %vm174, %v159, 0
      %v224 = vsel %vm174, %v160, 0
      %v227 = vsel %vm174, %v161, 0
      %v230 = vsel %vm174, %v162, 0
      %v233 = vsel %vm174, %v163, 0
      %v236 = vsel %vm174, %v164, 0
      %v239 = vsel %vm174, %v165, 0
      %v242 = vsel %vm174, %v166, 0
      %v245 = vsel %vm174, %v167, 0
      %v248 = vsel %vm174, %v168, 0
      %vm250 = vcmask 1043456
      %v252 = vsel %vm250, %v173, 0
      %254 = vmatprep.subr.mxu0 0.0
      %255 = vmatpush1.msra.mxu0 0.0
      %256 = vmatprep.subr.mxu0 0.0
      %257 = vmatpush1.msra.mxu0 0.0
      %258 = vmatprep.subr.mxu0 0.0
      %259 = vmatpush1.msra.mxu0 0.0
      %260 = vmatprep.subr.mxu0 0.0
      %261 = vmatpush1.msra.mxu0 0.0
      %262 = vmatprep.subr.mxu0 0.0
      %263 = vmatpush1.msra.mxu0 0.0
      %264 = vmatprep.subr.mxu0 0.0
      %265 = vmatpush1.msra.mxu0 0.0
      %266 = vmatprep.subr.mxu0 0.0
      %267 = vmatpush1.msra.mxu0 0.0
      %268 = vmatprep.subr.mxu0 0.0
      %269 = vmatpush1.msra.mxu0 0.0
      %270 = vmatprep.subr.mxu0 0.0
      %271 = vmatpush1.msra.mxu0 0.0
      %272 = vmatprep.subr.mxu0 0.0
      %273 = vmatpush1.msra.mxu0 0.0
      %274 = vmatprep.subr.mxu0 0.0
      %275 = vmatpush1.msra.mxu0 0.0
      %276 = vmatprep.subr.mxu0 0.0
      %277 = vmatpush1.msra.mxu0 %v252
      %278 = vmatprep.subr.mxu0 0.0
      %279 = vmatpush1.msra.mxu0 %v172
      %280 = vmatprep.subr.mxu0 0.0
      %281 = vmatpush1.msra.mxu0 %v171
      %282 = vmatprep.subr.mxu0 0.0
      %283 = vmatpush1.msra.mxu0 %v170
      %284 = vmatprep.subr.mxu0 0.0
      %285 = vmatpush1.msra.mxu0 %v169
      %286 = vmatprep.subr.mxu0 0.0
      %287 = vmatpush2.msra.mxu0 0.0
      %288 = vmatprep.subr.mxu0 0.0
      %289 = vmatpush2.msra.mxu0 0.0
      %290 = vmatprep.subr.mxu0 0.0
      %291 = vmatpush2.msra.mxu0 0.0
      %292 = vmatprep.subr.mxu0 0.0
      %293 = vmatpush2.msra.mxu0 0.0
      %294 = vmatprep.subr.mxu0 0.0
      %295 = vmatpush2.msra.mxu0 0.0
      %296 = vmatprep.subr.mxu0 0.0
      %297 = vmatpush2.msra.mxu0 0.0
      %298 = vmatprep.subr.mxu0 0.0
      %299 = vmatpush2.msra.mxu0 0.0
      %300 = vmatprep.subr.mxu0 0.0
      %301 = vmatpush2.msra.mxu0 0.0
      %302 = vmatprep.subr.mxu0 0.0
      %303 = vmatpush2.msra.mxu0 0.0
      %304 = vmatprep.subr.mxu0 0.0
      %305 = vmatpush2.msra.mxu0 0.0
      %306 = vmatprep.subr.mxu0 0.0
      %307 = vmatpush2.msra.mxu0 0.0
      %308 = vmatprep.subr.mxu0 0.0
      %309 = vmatpush2.msra.mxu0 0.0
      %310 = vmatprep.subr.mxu0 0.0
      %311 = vmatpush2.msra.mxu0 0.0
      %312 = vmatprep.subr.mxu0 0.0
      %313 = vmatpush2.msra.mxu0 0.0
      %314 = vmatprep.subr.mxu0 0.0
      %315 = vmatpush2.msra.mxu0 0.0
      %316 = vmatprep.subr.mxu0 0.0
      %317 = vmatpush2.msra.mxu0 0.0
      %318 = vmatprep.mubr.f32.mxu0 0.0
      %319 = vmatmul.mubr.f32.gmra.mxu0 %v176
      %v320 = vpop.f32.mrf.mxu0
      %v321 = vadd.f32 0.0, %v320
      %v322 = vpop.f32.mrf.mxu0
      %323 = vmatprep.mubr.f32.mxu0 0.0
      %324 = vmatmul.mubr.f32.gmra.mxu0 %v179
      %v325 = vpop.f32.mrf.mxu0
      %v326 = vadd.f32 0.0, %v325
      %v327 = vpop.f32.mrf.mxu0
      %328 = vmatprep.mubr.f32.mxu0 0.0
      %329 = vmatmul.mubr.f32.gmra.mxu0 %v182
      %v330 = vpop.f32.mrf.mxu0
      %v331 = vadd.f32 0.0, %v330
      %v332 = vpop.f32.mrf.mxu0
      %333 = vmatprep.mubr.f32.mxu0 0.0
      %334 = vmatmul.mubr.f32.gmra.mxu0 %v185
      %v335 = vpop.f32.mrf.mxu0
      %v336 = vadd.f32 0.0, %v335
      %v337 = vpop.f32.mrf.mxu0
      %338 = vmatprep.mubr.f32.mxu0 0.0
      %339 = vmatmul.mubr.f32.gmra.mxu0 %v188
      %v340 = vpop.f32.mrf.mxu0
      %v341 = vadd.f32 0.0, %v340
      %v342 = vpop.f32.mrf.mxu0
      %343 = vmatprep.mubr.f32.mxu0 0.0
      %344 = vmatmul.mubr.f32.gmra.mxu0 %v191
      %v345 = vpop.f32.mrf.mxu0
      %v346 = vadd.f32 0.0, %v345
      %v347 = vpop.f32.mrf.mxu0
      %348 = vmatprep.mubr.f32.mxu0 0.0
      %349 = vmatmul.mubr.f32.gmra.mxu0 %v194
      %v350 = vpop.f32.mrf.mxu0
      %v351 = vadd.f32 0.0, %v350
      %v352 = vpop.f32.mrf.mxu0
      %353 = vmatprep.mubr.f32.mxu0 0.0
      %354 = vmatmul.mubr.f32.gmra.mxu0 %v197
      %v355 = vpop.f32.mrf.mxu0
      %v356 = vadd.f32 0.0, %v355
      %v357 = vpop.f32.mrf.mxu0
      %358 = vmatprep.mubr.f32.mxu0 0.0
      %359 = vmatmul.mubr.f32.gmra.mxu0 %v200
      %v360 = vpop.f32.mrf.mxu0
      %v361 = vadd.f32 0.0, %v360
      %v362 = vpop.f32.mrf.mxu0
      %363 = vmatprep.mubr.f32.mxu0 0.0
      %364 = vmatmul.mubr.f32.gmra.mxu0 %v203
      %v365 = vpop.f32.mrf.mxu0
      %v366 = vadd.f32 0.0, %v365
      %v367 = vpop.f32.mrf.mxu0
      %368 = vmatprep.mubr.f32.mxu0 0.0
      %369 = vmatmul.mubr.f32.gmra.mxu0 %v206
      %v370 = vpop.f32.mrf.mxu0
      %v371 = vadd.f32 0.0, %v370
      %v372 = vpop.f32.mrf.mxu0
      %373 = vmatprep.mubr.f32.mxu0 0.0
      %374 = vmatmul.mubr.f32.gmra.mxu0 %v209
      %v375 = vpop.f32.mrf.mxu0
      %v376 = vadd.f32 0.0, %v375
      %v377 = vpop.f32.mrf.mxu0
      %378 = vmatprep.mubr.f32.mxu0 0.0
      %379 = vmatmul.mubr.f32.gmra.mxu0 %v212
      %v380 = vpop.f32.mrf.mxu0
      %v381 = vadd.f32 0.0, %v380
      %v382 = vpop.f32.mrf.mxu0
      %383 = vmatprep.mubr.f32.mxu0 0.0
      %384 = vmatmul.mubr.f32.gmra.mxu0 %v215
      %v385 = vpop.f32.mrf.mxu0
      %v386 = vadd.f32 0.0, %v385
      %v387 = vpop.f32.mrf.mxu0
      %388 = vmatprep.mubr.f32.mxu0 0.0
      %389 = vmatmul.mubr.f32.gmra.mxu0 %v218
      %v390 = vpop.f32.mrf.mxu0
      %v391 = vadd.f32 0.0, %v390
      %v392 = vpop.f32.mrf.mxu0
      %393 = vmatprep.mubr.f32.mxu0 0.0
      %394 = vmatmul.mubr.f32.gmra.mxu0 %v221
      %v395 = vpop.f32.mrf.mxu0
      %v396 = vadd.f32 0.0, %v395
      %v397 = vpop.f32.mrf.mxu0
      %398 = vmatprep.mubr.f32.mxu0 0.0
      %399 = vmatmul.mubr.f32.gmra.mxu0 %v224
      %v400 = vpop.f32.mrf.mxu0
      %v401 = vadd.f32 0.0, %v400
      %v402 = vpop.f32.mrf.mxu0
      %403 = vmatprep.mubr.f32.mxu0 0.0
      %404 = vmatmul.mubr.f32.gmra.mxu0 %v227
      %v405 = vpop.f32.mrf.mxu0
      %v406 = vadd.f32 0.0, %v405
      %v407 = vpop.f32.mrf.mxu0
      %408 = vmatprep.mubr.f32.mxu0 0.0
      %409 = vmatmul.mubr.f32.gmra.mxu0 %v230
      %v410 = vpop.f32.mrf.mxu0
      %v411 = vadd.f32 0.0, %v410
      %v412 = vpop.f32.mrf.mxu0
      %413 = vmatprep.mubr.f32.mxu0 0.0
      %414 = vmatmul.mubr.f32.gmra.mxu0 %v233
      %v415 = vpop.f32.mrf.mxu0
      %v416 = vadd.f32 0.0, %v415
      %v417 = vpop.f32.mrf.mxu0
      %418 = vmatprep.mubr.f32.mxu0 0.0
      %419 = vmatmul.mubr.f32.gmra.mxu0 %v236
      %v420 = vpop.f32.mrf.mxu0
      %v421 = vadd.f32 0.0, %v420
      %v422 = vpop.f32.mrf.mxu0
      %423 = vmatprep.mubr.f32.mxu0 0.0
      %424 = vmatmul.mubr.f32.gmra.mxu0 %v239
      %v425 = vpop.f32.mrf.mxu0
      %v426 = vadd.f32 0.0, %v425
      %v427 = vpop.f32.mrf.mxu0
      %428 = vmatprep.mubr.f32.mxu0 0.0
      %429 = vmatmul.mubr.f32.gmra.mxu0 %v242
      %v430 = vpop.f32.mrf.mxu0
      %v431 = vadd.f32 0.0, %v430
      %v432 = vpop.f32.mrf.mxu0
      %433 = vmatprep.mubr.f32.mxu0 0.0
      %434 = vmatmul.mubr.f32.gmra.mxu0 %v245
      %v435 = vpop.f32.mrf.mxu0
      %v436 = vadd.f32 0.0, %v435
      %v437 = vpop.f32.mrf.mxu0
      %438 = vmatprep.mubr.f32.mxu0 0.0
      %439 = vmatmul.mubr.f32.gmra.mxu0 %v248
      %v440 = vpop.f32.mrf.mxu0
      %v441 = vadd.f32 0.0, %v440
      %v442 = vpop.f32.mrf.mxu0
      %443 = vdwg.mxu0
      %vm444 = vcmask 130048
      %445 = vst.msk [vmem:[%s143] sm:$0xff] %vm444, %v321
      %446 = vst.msk [vmem:[%s143 + $0x8] sm:$0xff] %vm444, %v326
      %447 = vst.msk [vmem:[%s143 + $0x10] sm:$0xff] %vm444, %v331
      %448 = vst.msk [vmem:[%s143 + $0x18] sm:$0xff] %vm444, %v336
      %449 = vst.msk [vmem:[%s143 + $0x20] sm:$0xff] %vm444, %v341
      %450 = vst.msk [vmem:[%s143 + $0x28] sm:$0xff] %vm444, %v346
      %451 = vst.msk [vmem:[%s143 + $0x30] sm:$0xff] %vm444, %v351
      %452 = vst.msk [vmem:[%s143 + $0x38] sm:$0xff] %vm444, %v356
      %453 = vst.msk [vmem:[%s143 + $0x40] sm:$0xff] %vm444, %v361
      %454 = vst.msk [vmem:[%s143 + $0x48] sm:$0xff] %vm444, %v366
      %455 = vst.msk [vmem:[%s143 + $0x50] sm:$0xff] %vm444, %v371
      %456 = vst.msk [vmem:[%s143 + $0x58] sm:$0xff] %vm444, %v376
      %457 = vst.msk [vmem:[%s143 + $0x60] sm:$0xff] %vm444, %v381
      %458 = vst.msk [vmem:[%s143 + $0x68] sm:$0xff] %vm444, %v386
      %459 = vst.msk [vmem:[%s143 + $0x70] sm:$0xff] %vm444, %v391
      %460 = vst.msk [vmem:[%s143 + $0x78] sm:$0xff] %vm444, %v396
      %461 = vst.msk [vmem:[%s143 + $0x80] sm:$0xff] %vm444, %v401
      %462 = vst.msk [vmem:[%s143 + $0x88] sm:$0xff] %vm444, %v406
      %463 = vst.msk [vmem:[%s143 + $0x90] sm:$0xff] %vm444, %v411
      %464 = vst.msk [vmem:[%s143 + $0x98] sm:$0xff] %vm444, %v416
      %465 = vst.msk [vmem:[%s143 + $0xa0] sm:$0xff] %vm444, %v421
      %466 = vst.msk [vmem:[%s143 + $0xa8] sm:$0xff] %vm444, %v426
      %467 = vst.msk [vmem:[%s143 + $0xb0] sm:$0xff] %vm444, %v431
      %468 = vst.msk [vmem:[%s143 + $0xb8] sm:$0xff] %vm444, %v436
      %vm469 = vcmask 125952
      %470 = vst.msk [vmem:[%s143 + $0xc0] sm:$0xf] %vm469, %v441
      %p471 = scmp.lt.s32.totalorder %s13, 1
      %s472 = scalar_select %p471, %s13, 1
      %s473 = smul.addr %s472, 25
      %s474 = smul.addr %s473, 8
      %s475 = scalar_lea.vmem %s2, %s474
      // Predicated region
      $region29: #{tpu_custom_call.1} parent=27 // pred_check
        %p476 = pneg %p78
      $region30: #{tpu_custom_call.1} parent=27 // pred_check_branch
        %478 = sbr.rel (%p476) target = $region32
      $region31: #{tpu_custom_call.1} parent=27 // pred_region
        _
      $region32: #{tpu_custom_call.1} parent=27 // pred_fallthru
        _
    $region28: #{tpu_custom_call.1} parent=5 // pred_fallthru
      _
    %p479 = scmp.le.s32.totalorder 2, %s8
    // Predicated region
    $region33: #{tpu_custom_call.1} parent=5 // pred_check
      %p480 = pneg %p479
    $region34: #{tpu_custom_call.1} parent=5 // pred_check_branch
      %482 = sbr.rel (%p480) target = $region36
    $region35: #{tpu_custom_call.1} parent=5 // pred_region
      %s483 = ssub.s32 %s8, 2
      // Predicated region
      $region37: #{tpu_custom_call.1} parent=35 // pred_check
        %p484 = pneg %p84
      $region38: #{tpu_custom_call.1} parent=35 // pred_check_branch
        %486 = sbr.rel (%p484) target = $region40
      $region39: #{tpu_custom_call.1} parent=35 // pred_region
        %p487 = scmp.lt.s32.totalorder %s14, 1
        %s488 = scalar_select %p487, %s14, 1
        %s489 = smul.addr %s488, 25
        %s490 = smul.addr %s489, 8
        %s491 = scalar_lea.vmem %s2, %s490
      $region40: #{tpu_custom_call.1} parent=35 // pred_fallthru
        _
    $region36: #{tpu_custom_call.1} parent=5 // pred_fallthru
      _
  $region6: #{tpu_custom_call.1} parent=0 // loop_footer
    %s12 = sadd.s32 1, %s8
  $region7: #{tpu_custom_call.1} parent=0 // loop_footer_branch
    %7 = sbr.rel target = $region3
  $region8: #{tpu_custom_call.1} parent=0 // loop_exit
    _

</llo_original>
